<compile_context>
chip_gen: v7x
topology: tpu7x:2x2x1
jax: 0.10.0
libtpu: 0.0.40
codegen_flags: <defaults>
</compile_context>

<pallas_src>
import functools

import jax
import jax.numpy as jnp
from jax import lax
from jax.experimental import pallas as pl


def _dgcn_fused_kernel(x_ref, tkt_ref, w_ref, o_ref, *, K):
    # x_ref  : [N, P*C]       packed graph signals (p = b*T + t on the lane axis)
    # tkt_ref: [K, N, N]      pre-built T_k^T (alpha/beta already folded in)
    # w_ref  : [K, P*C, P*CO] block-diagonal I_P ⊗ Theta_k
    # o_ref  : [N, P*CO]      lane-dense output
    xg = jnp.maximum(x_ref[...], 0.0)                                   # relu(x)

    acc = jnp.zeros(o_ref.shape, jnp.float32)
    for k in range(K):                                                  # K small & static -> unrolled
        r = jnp.dot(tkt_ref[k], xg, preferred_element_type=jnp.float32)         # [N, P*C]
        acc = acc + jnp.dot(r, w_ref[k], preferred_element_type=jnp.float32)    # [N, P*CO]

    y = jnp.maximum(acc, 0.0)                                           # relu before BN

    # Fused BatchNorm2d(affine=False), training-mode batch stats:
    # per-node mean/var over (B, COUT, T) == lane-axis reduction of [N, P*CO].
    mean = jnp.mean(y, axis=1, keepdims=True)
    d = y - mean
    var = jnp.mean(d * d, axis=1, keepdims=True)                        # biased variance
    o_ref[...] = d * lax.rsqrt(var + jnp.float32(1e-5))


def dgcn_forward(x, nodevec1, nodevec2, cheb, alpha, theta):
    B, N, C, T = x.shape
    K = cheb.shape[0]
    COUT = theta.shape[-1]
    P = B * T

    # ---- grid-invariant parameter preprocessing (tiny; pure JAX, done once) ----
    coef = jax.nn.softmax(alpha, axis=1)                    # == F.softmax(alpha[k], dim=0)
    adp = jax.nn.relu(nodevec1 @ nodevec2)
    adp = jnp.where(adp == 0.0, jnp.float32(-1e10), adp)    # mask exact zeros
    adp = jax.nn.softmax(adp, axis=1)                       # softmax over dim=1 (rows)
    # T_k^T = alpha_k * cheb_k^T + beta_k * adp^T  (alpha/beta folded in here)
    tkt = (coef[:, 0][:, None, None] * jnp.transpose(cheb, (0, 2, 1))
           + coef[:, 1][:, None, None] * adp.T).astype(jnp.float32)     # [K, N, N]

    # Block-diagonal Theta: W_k = I_P ⊗ Theta_k, so the per-(b,t) channel mix is a
    # single lane-dense [P*C, P*COUT] matmul (no in-kernel reshapes).
    eye_p = jnp.eye(P, dtype=jnp.float32)
    w = jnp.einsum('pq,kcd->kpcqd', eye_p, theta.astype(jnp.float32)).reshape(
        K, P * C, P * COUT)

    # ---- layout plumbing: [B, N, C, T] -> [N, P*C]  (p = b*T + t) ----
    x2 = jnp.transpose(x, (1, 0, 3, 2)).reshape(N, P * C).astype(jnp.float32)

    kernel = functools.partial(_dgcn_fused_kernel, K=K)
    z2 = pl.pallas_call(
        kernel,
        out_shape=jax.ShapeDtypeStruct((N, P * COUT), jnp.float32),
    )(x2, tkt, w)

    # TODO(synk): running_mean/running_var buffer updates of nn.BatchNorm2d are not
    # modeled; they do not affect the training-mode forward output.

    # back to PyTorch output layout [B, N, COUT, T]
    z = z2.reshape(N, B, T, COUT)
    return jnp.transpose(z, (1, 0, 3, 2))


def dgcn_reference(x, nodevec1, nodevec2, cheb, alpha, theta):
    """Pure-JAX transcription of the PyTorch forward (for verification)."""
    x = jnp.maximum(x, 0.0)
    B, N, C, T = x.shape
    K = cheb.shape[0]
    adp = jax.nn.relu(nodevec1 @ nodevec2)
    adp = jnp.where(adp == 0.0, -1e10, adp)
    adp = jax.nn.softmax(adp, axis=1)
    outs = []
    for t in range(T):
        gs = x[:, :, :, t]
        out = jnp.zeros((B, N, theta.shape[-1]), jnp.float32)
        for k in range(K):
            ab = jax.nn.softmax(alpha[k], axis=0)
            Tk = ab[0] * cheb[k] + ab[1] * adp
            rhs = jnp.transpose(jnp.matmul(jnp.transpose(gs, (0, 2, 1)), Tk), (0, 2, 1))
            out = out + jnp.matmul(rhs, theta[k])
        outs.append(out[..., None])
    outs = jnp.maximum(jnp.concatenate(outs, axis=-1), 0.0)             # [B, N, 4, T]
    mean = jnp.mean(outs, axis=(0, 2, 3), keepdims=True)
    var = jnp.mean((outs - mean) ** 2, axis=(0, 2, 3), keepdims=True)
    return (outs - mean) / jnp.sqrt(var + 1e-5)


if __name__ == "__main__":
    key = jax.random.PRNGKey(0)
    B, N, C, T = 2, 8, 4, 8      # c_in = 4 (Theta is 4x4); c_out = N for the BN layer
    K, D = 3, 10
    COUT = 4

    k_x, k_nv1, k_nv2, k_adj, k_alpha, k_theta = jax.random.split(key, 6)

    x = jax.random.normal(k_x, (B, N, C, T), jnp.float32)

    # node embeddings: magnitudes bounded away from zero so the relu/mask edge
    # (adp == 0) is numerically unambiguous; alternating column signs exercise
    # both branches of the mask.
    nodevec1 = jax.random.uniform(k_nv1, (N, D), jnp.float32, 0.5, 1.5)
    col_sign = jnp.where(jnp.arange(N) % 2 == 0, 1.0, -1.0).astype(jnp.float32)
    nodevec2 = jax.random.uniform(k_nv2, (D, N), jnp.float32, 0.5, 1.5) * col_sign[None, :]

    # Chebyshev polynomials of a scaled Laplacian of a random symmetric graph
    a = jax.random.uniform(k_adj, (N, N), jnp.float32)
    a = (a + a.T) / 2.0
    a = a - jnp.diag(jnp.diag(a))
    lap = jnp.diag(jnp.sum(a, axis=1)) - a
    l_tilde = (2.0 * lap / jnp.max(jnp.abs(jnp.linalg.eigvalsh(lap)))) - jnp.eye(N)
    chebs = [jnp.eye(N, dtype=jnp.float32), l_tilde.astype(jnp.float32)]
    for _ in range(2, K):
        chebs.append(2.0 * l_tilde @ chebs[-1] - chebs[-2])
    cheb = jnp.stack(chebs[:K]).astype(jnp.float32)

    alpha = jax.random.normal(k_alpha, (K, 2), jnp.float32)

    # Xavier-uniform init of Theta: K x (4, 4)
    bound = (6.0 / (4 + 4)) ** 0.5
    theta = jax.random.uniform(k_theta, (K, 4, 4), jnp.float32, -bound, bound)

    out = jax.block_until_ready(dgcn_forward(x, nodevec1, nodevec2, cheb, alpha, theta))
    ref = dgcn_reference(x, nodevec1, nodevec2, cheb, alpha, theta)

    assert out.shape == (B, N, COUT, T), out.shape
    assert jnp.allclose(out, ref, atol=3e-2, rtol=3e-2), float(jnp.max(jnp.abs(out - ref)))
    print("KERNEL_OK")
</pallas_src>

<mosaic_0001>
module attributes {stable_mosaic.version = 11 : i64} {
  func.func @_dgcn_fused_kernel(%arg0: memref<8x64xf32, #tpu.memory_space<vmem>>, %arg1: memref<3x8x8xf32, #tpu.memory_space<vmem>>, %arg2: memref<3x64x64xf32, #tpu.memory_space<vmem>>, %arg3: memref<8x64xf32, #tpu.memory_space<vmem>>) attributes {dimension_semantics = [], scalar_prefetch = 0 : i64, scratch_operands = 0 : i64, tpu.core_type = #tpu.core_type<tc>} {
    %c0 = arith.constant 0 : index
    %c0_0 = arith.constant 0 : index
    %0 = vector.load %arg0[%c0, %c0_0] : memref<8x64xf32, #tpu.memory_space<vmem>>, vector<8x64xf32>
    %cst = arith.constant 0.000000e+00 : f32
    %1 = vector.broadcast %cst : f32 to vector<8x64xf32>
    %2 = arith.maximumf %0, %1 : vector<8x64xf32>
    %cst_1 = arith.constant 0.000000e+00 : f32
    %3 = vector.broadcast %cst_1 : f32 to vector<8x64xf32>
    %c0_2 = arith.constant 0 : index
    %c0_3 = arith.constant 0 : index
    %c0_4 = arith.constant 0 : index
    %4 = vector.load %arg1[%c0_2, %c0_3, %c0_4] : memref<3x8x8xf32, #tpu.memory_space<vmem>>, vector<1x8x8xf32>
    %5 = vector.shape_cast %4 : vector<1x8x8xf32> to vector<8x8xf32>
    %cst_5 = arith.constant dense<0.000000e+00> : vector<8x64xf32>
    %6 = tpu.matmul %5, %2, %cst_5 {dimension_numbers = #tpu.dot_dimension_numbers<[1], [0], [0], [1], [0, 0, 1, 1], [], []>} : vector<8x8xf32>, vector<8x64xf32>, vector<8x64xf32> -> vector<8x64xf32>
    %c0_6 = arith.constant 0 : index
    %c0_7 = arith.constant 0 : index
    %c0_8 = arith.constant 0 : index
    %7 = vector.load %arg2[%c0_6, %c0_7, %c0_8] : memref<3x64x64xf32, #tpu.memory_space<vmem>>, vector<1x64x64xf32>
    %8 = vector.shape_cast %7 : vector<1x64x64xf32> to vector<64x64xf32>
    %cst_9 = arith.constant dense<0.000000e+00> : vector<8x64xf32>
    %9 = tpu.matmul %6, %8, %cst_9 {dimension_numbers = #tpu.dot_dimension_numbers<[1], [0], [0], [1], [0, 0, 1, 1], [], []>} : vector<8x64xf32>, vector<64x64xf32>, vector<8x64xf32> -> vector<8x64xf32>
    %10 = arith.addf %3, %9 : vector<8x64xf32>
    %c1 = arith.constant 1 : index
    %c0_10 = arith.constant 0 : index
    %c0_11 = arith.constant 0 : index
    %11 = vector.load %arg1[%c1, %c0_10, %c0_11] : memref<3x8x8xf32, #tpu.memory_space<vmem>>, vector<1x8x8xf32>
    %12 = vector.shape_cast %11 : vector<1x8x8xf32> to vector<8x8xf32>
    %cst_12 = arith.constant dense<0.000000e+00> : vector<8x64xf32>
    %13 = tpu.matmul %12, %2, %cst_12 {dimension_numbers = #tpu.dot_dimension_numbers<[1], [0], [0], [1], [0, 0, 1, 1], [], []>} : vector<8x8xf32>, vector<8x64xf32>, vector<8x64xf32> -> vector<8x64xf32>
    %c1_13 = arith.constant 1 : index
    %c0_14 = arith.constant 0 : index
    %c0_15 = arith.constant 0 : index
    %14 = vector.load %arg2[%c1_13, %c0_14, %c0_15] : memref<3x64x64xf32, #tpu.memory_space<vmem>>, vector<1x64x64xf32>
    %15 = vector.shape_cast %14 : vector<1x64x64xf32> to vector<64x64xf32>
    %cst_16 = arith.constant dense<0.000000e+00> : vector<8x64xf32>
    %16 = tpu.matmul %13, %15, %cst_16 {dimension_numbers = #tpu.dot_dimension_numbers<[1], [0], [0], [1], [0, 0, 1, 1], [], []>} : vector<8x64xf32>, vector<64x64xf32>, vector<8x64xf32> -> vector<8x64xf32>
    %17 = arith.addf %10, %16 : vector<8x64xf32>
    %c2 = arith.constant 2 : index
    %c0_17 = arith.constant 0 : index
    %c0_18 = arith.constant 0 : index
    %18 = vector.load %arg1[%c2, %c0_17, %c0_18] : memref<3x8x8xf32, #tpu.memory_space<vmem>>, vector<1x8x8xf32>
    %19 = vector.shape_cast %18 : vector<1x8x8xf32> to vector<8x8xf32>
    %cst_19 = arith.constant dense<0.000000e+00> : vector<8x64xf32>
    %20 = tpu.matmul %19, %2, %cst_19 {dimension_numbers = #tpu.dot_dimension_numbers<[1], [0], [0], [1], [0, 0, 1, 1], [], []>} : vector<8x8xf32>, vector<8x64xf32>, vector<8x64xf32> -> vector<8x64xf32>
    %c2_20 = arith.constant 2 : index
    %c0_21 = arith.constant 0 : index
    %c0_22 = arith.constant 0 : index
    %21 = vector.load %arg2[%c2_20, %c0_21, %c0_22] : memref<3x64x64xf32, #tpu.memory_space<vmem>>, vector<1x64x64xf32>
    %22 = vector.shape_cast %21 : vector<1x64x64xf32> to vector<64x64xf32>
    %cst_23 = arith.constant dense<0.000000e+00> : vector<8x64xf32>
    %23 = tpu.matmul %20, %22, %cst_23 {dimension_numbers = #tpu.dot_dimension_numbers<[1], [0], [0], [1], [0, 0, 1, 1], [], []>} : vector<8x64xf32>, vector<64x64xf32>, vector<8x64xf32> -> vector<8x64xf32>
    %24 = arith.addf %17, %23 : vector<8x64xf32>
    %cst_24 = arith.constant 0.000000e+00 : f32
    %25 = vector.broadcast %cst_24 : f32 to vector<8x64xf32>
    %26 = arith.maximumf %24, %25 : vector<8x64xf32>
    %cst_25 = arith.constant dense<0.000000e+00> : vector<8xf32>
    %27 = vector.multi_reduction <add>, %26, %cst_25 [1] : vector<8x64xf32> to vector<8xf32>
    %28 = vector.shape_cast %27 : vector<8xf32> to vector<8x1xf32>
    %cst_26 = arith.constant 6.400000e+01 : f32
    %29 = vector.broadcast %cst_26 : f32 to vector<8x1xf32>
    %30 = arith.divf %28, %29 : vector<8x1xf32>
    %31 = vector.broadcast %30 : vector<8x1xf32> to vector<8x64xf32>
    %32 = arith.subf %26, %31 : vector<8x64xf32>
    %33 = arith.mulf %32, %32 : vector<8x64xf32>
    %cst_27 = arith.constant dense<0.000000e+00> : vector<8xf32>
    %34 = vector.multi_reduction <add>, %33, %cst_27 [1] : vector<8x64xf32> to vector<8xf32>
    %35 = vector.shape_cast %34 : vector<8xf32> to vector<8x1xf32>
    %cst_28 = arith.constant 6.400000e+01 : f32
    %36 = vector.broadcast %cst_28 : f32 to vector<8x1xf32>
    %37 = arith.divf %35, %36 : vector<8x1xf32>
    %cst_29 = arith.constant 9.99999974E-6 : f32
    %38 = vector.broadcast %cst_29 : f32 to vector<8x1xf32>
    %39 = arith.addf %37, %38 : vector<8x1xf32>
    %40 = math.rsqrt %39 : vector<8x1xf32>
    %41 = vector.broadcast %40 : vector<8x1xf32> to vector<8x64xf32>
    %42 = arith.mulf %32, %41 : vector<8x64xf32>
    %c0_30 = arith.constant 0 : index
    %c0_31 = arith.constant 0 : index
    %43 = vector.load %arg3[%c0_30, %c0_31] : memref<8x64xf32, #tpu.memory_space<vmem>>, vector<8x64xf32>
    tpu.vector_store %arg3[%c0_30, %c0_31], %42 {strides = array<i32>} : memref<8x64xf32, #tpu.memory_space<vmem>>, vector<8x64xf32>,
    return
  }
}

</mosaic_0001>

<llo_original>
// kernel: tpu_custom_call.1
$region0: #{tpu_custom_call.1}
  #allocation0 [shape = 'u32[]', space=smem, size = 0x4, offset = 0x4, fixed_abs, tag = 'smem constant byte address 0x4 - core index']
  #allocation1 [shape = 'u32[144,128]{1,0:T(1,128)}', space=vmem, size = 0x12000, scoped, tag = 'internal scratch']
  %s0 = inlined_call_operand.hbm [shape: f32[8,64], index: 0, kind: input, shape index: {}]
  %s1 = inlined_call_operand.hbm [shape: f32[3,8,8], index: 1, kind: input, shape index: {}]
  %s2 = inlined_call_operand.hbm [shape: f32[3,64,64], index: 2, kind: input, shape index: {}]
  %s3 = inlined_call_operand.hbm [shape: f32[8,64], index: 3, kind: output, shape index: {}]
  %s4 = sld [smem:[#allocation0]]
  $region34: #{tpu_custom_call.1} parent=0
    _
  %s6 = ssub.s32 1, %s4
  %s7 = scalar_select 0, %s6, %s4
  $region1: #{tpu_custom_call.1} parent=0
    #allocation2 [shape = 'u8[4096]{0}', space=vmem, size = 0x1000, scoped, tag = 'input window, operand 0, single buffered']
    #allocation3 [shape = 's32[1]{0}', space=sflag, size = 0x4, scoped, tag = 'scoped memory for tpu_custom_call.1']
    #allocation4 [shape = 's32[1]{0}', space=sflag, size = 0x4, scoped, tag = 'scoped memory for tpu_custom_call.1']
    #allocation5 [shape = 'u8[12288]{0}', space=vmem, size = 0x3000, scoped, tag = 'input window, operand 1, single buffered']
    #allocation6 [shape = 's32[1]{0}', space=sflag, size = 0x4, scoped, tag = 'scoped memory for tpu_custom_call.1']
    #allocation7 [shape = 'u8[98304]{0}', space=vmem, size = 0x18000, scoped, tag = 'input window, operand 2, single buffered']
    #allocation8 [shape = 'u8[4096]{0}', space=vmem, size = 0x1000, scoped, tag = 'output window, operand 0, single buffered']
    %8 = vsyncpa [#allocation3], 0
    %9 = vsyncpa [#allocation6], 0
    %10 = vsyncpa [#allocation4], 0
    // Predicated region
    $region2: #{tpu_custom_call.1} parent=1 // pred_check
      _
    $region3: #{tpu_custom_call.1} parent=1 // pred_check_branch
      %12 = sbr.rel (0) target = $region5
    $region4: #{tpu_custom_call.1} parent=1 // pred_region
      %s14 = ssub.s32 128, 128
      %15 = vsyncadd [#allocation3], %s14
      %s17 = sshll.u32 [#allocation2], 4
      %s18 = int_to_ptr.vmem [resolvable:$true] %s17
      %20 = dma.hbm_to_vmem [thread:$0]  %s0, 128, %s18, [#allocation3]
    $region5: #{tpu_custom_call.1} parent=1 // pred_fallthru
      _
    // Predicated region
    $region6: #{tpu_custom_call.1} parent=1 // pred_check
      _
    $region7: #{tpu_custom_call.1} parent=1 // pred_check_branch
      %22 = sbr.rel (0) target = $region9
    $region8: #{tpu_custom_call.1} parent=1 // pred_region
      %s24 = ssub.s32 384, 384
      %25 = vsyncadd [#allocation6], %s24
      %s26 = sshll.u32 [#allocation5], 4
      %s27 = int_to_ptr.vmem [resolvable:$true] %s26
      %32 = dma.hbm_to_vmem [thread:$0]  %s1, 384, %s27, [#allocation6], 128, 128, 8
    $region9: #{tpu_custom_call.1} parent=1 // pred_fallthru
      _
    // Predicated region
    $region10: #{tpu_custom_call.1} parent=1 // pred_check
      _
    $region11: #{tpu_custom_call.1} parent=1 // pred_check_branch
      %34 = sbr.rel (0) target = $region13
    $region12: #{tpu_custom_call.1} parent=1 // pred_region
      %s36 = ssub.s32 3072, 3072
      %37 = vsyncadd [#allocation6], %s36
      %s38 = sshll.u32 [#allocation7], 4
      %s39 = int_to_ptr.vmem [resolvable:$true] %s38
      %44 = dma.hbm_to_vmem [thread:$0]  %s2, 3072, %s39, [#allocation6], 128, 128, 8
    $region13: #{tpu_custom_call.1} parent=1 // pred_fallthru
      _
    // Predicated region
    $region14: #{tpu_custom_call.1} parent=1 // pred_check
      _
    $region15: #{tpu_custom_call.1} parent=1 // pred_check_branch
      %46 = sbr.rel (0) target = $region17
    $region16: #{tpu_custom_call.1} parent=1 // pred_region
      %47 = dma.done [#allocation3], 128
    $region17: #{tpu_custom_call.1} parent=1 // pred_fallthru
      _
    // Predicated region
    $region18: #{tpu_custom_call.1} parent=1 // pred_check
      _
    $region19: #{tpu_custom_call.1} parent=1 // pred_check_branch
      %49 = sbr.rel (0) target = $region21
    $region20: #{tpu_custom_call.1} parent=1 // pred_region
      %50 = dma.done [#allocation6], 384
    $region21: #{tpu_custom_call.1} parent=1 // pred_fallthru
      _
    // Predicated region
    $region22: #{tpu_custom_call.1} parent=1 // pred_check
      _
    $region23: #{tpu_custom_call.1} parent=1 // pred_check_branch
      %52 = sbr.rel (0) target = $region25
    $region24: #{tpu_custom_call.1} parent=1 // pred_region
      %53 = dma.done [#allocation6], 3072
    $region25: #{tpu_custom_call.1} parent=1 // pred_fallthru
      _
    %v54 = vld [vmem:[#allocation2] sm:$0xff]
    %v55 = vmax.f32 %v54, 0.0
    %v56 = vld [vmem:[#allocation5] sm:$0xff]
    %vm57 = vcmask 64512
    %v59 = vsel %vm57, %v56, 0
    %61 = vmatprep.subr.mxu0 0.0
    %62 = vmatpush1.msra.mxu0 %v55
    %63 = vmatprep.subr.mxu0 0.0
    %64 = vmatpush1.msra.mxu0 0.0
    %65 = vmatprep.subr.mxu0 0.0
    %66 = vmatpush1.msra.mxu0 0.0
    %67 = vmatprep.subr.mxu0 0.0
    %68 = vmatpush1.msra.mxu0 0.0
    %69 = vmatprep.subr.mxu0 0.0
    %70 = vmatpush1.msra.mxu0 0.0
    %71 = vmatprep.subr.mxu0 0.0
    %72 = vmatpush1.msra.mxu0 0.0
    %73 = vmatprep.subr.mxu0 0.0
    %74 = vmatpush1.msra.mxu0 0.0
    %75 = vmatprep.subr.mxu0 0.0
    %76 = vmatpush1.msra.mxu0 0.0
    %77 = vmatprep.subr.mxu0 0.0
    %78 = vmatpush1.msra.mxu0 0.0
    %79 = vmatprep.subr.mxu0 0.0
    %80 = vmatpush1.msra.mxu0 0.0
    %81 = vmatprep.subr.mxu0 0.0
    %82 = vmatpush1.msra.mxu0 0.0
    %83 = vmatprep.subr.mxu0 0.0
    %84 = vmatpush1.msra.mxu0 0.0
    %85 = vmatprep.subr.mxu0 0.0
    %86 = vmatpush1.msra.mxu0 0.0
    %87 = vmatprep.subr.mxu0 0.0
    %88 = vmatpush1.msra.mxu0 0.0
    %89 = vmatprep.subr.mxu0 0.0
    %90 = vmatpush1.msra.mxu0 0.0
    %91 = vmatprep.subr.mxu0 0.0
    %92 = vmatpush1.msra.mxu0 0.0
    %93 = vmatprep.subr.mxu0 0.0
    %94 = vmatpush1.msra.mxu0 0.0
    %95 = vmatprep.subr.mxu0 0.0
    %96 = vmatpush1.msra.mxu0 0.0
    %97 = vmatprep.subr.mxu0 0.0
    %98 = vmatpush1.msra.mxu0 0.0
    %99 = vmatprep.subr.mxu0 0.0
    %100 = vmatpush1.msra.mxu0 0.0
    %101 = vmatprep.subr.mxu0 0.0
    %102 = vmatpush1.msra.mxu0 0.0
    %103 = vmatprep.subr.mxu0 0.0
    %104 = vmatpush1.msra.mxu0 0.0
    %105 = vmatprep.subr.mxu0 0.0
    %106 = vmatpush1.msra.mxu0 0.0
    %107 = vmatprep.subr.mxu0 0.0
    %108 = vmatpush1.msra.mxu0 0.0
    %109 = vmatprep.subr.mxu0 0.0
    %110 = vmatpush1.msra.mxu0 0.0
    %111 = vmatprep.subr.mxu0 0.0
    %112 = vmatpush1.msra.mxu0 0.0
    %113 = vmatprep.subr.mxu0 0.0
    %114 = vmatpush1.msra.mxu0 0.0
    %115 = vmatprep.subr.mxu0 0.0
    %116 = vmatpush1.msra.mxu0 0.0
    %117 = vmatprep.subr.mxu0 0.0
    %118 = vmatpush1.msra.mxu0 0.0
    %119 = vmatprep.subr.mxu0 0.0
    %120 = vmatpush1.msra.mxu0 0.0
    %121 = vmatprep.subr.mxu0 0.0
    %122 = vmatpush1.msra.mxu0 0.0
    %123 = vmatprep.subr.mxu0 0.0
    %124 = vmatpush1.msra.mxu0 0.0
    %125 = vmatprep.mubr.f32.mxu0 0.0
    %126 = vmatmul.mubr.f32.gmra.mrb[0].mxu0 %v59
    %v127 = vpop.f32.mrb[0].mxu0
    %v128 = vadd.f32 0.0, %v127
    %v129 = vpop.f32.mrb[0].mxu0
    %130 = vdwg.mxu0
    %v131 = vld [vmem:[#allocation7] sm:$0xff]
    %v132 = vld [vmem:[#allocation7 + $0x8] sm:$0xff]
    %v133 = vld [vmem:[#allocation7 + $0x10] sm:$0xff]
    %v134 = vld [vmem:[#allocation7 + $0x18] sm:$0xff]
    %v135 = vld [vmem:[#allocation7 + $0x20] sm:$0xff]
    %v136 = vld [vmem:[#allocation7 + $0x28] sm:$0xff]
    %v137 = vld [vmem:[#allocation7 + $0x30] sm:$0xff]
    %v138 = vld [vmem:[#allocation7 + $0x38] sm:$0xff]
    %s139 = scalar_lea.vmem [#allocation5], 8
    %v140 = vld [vmem:[%s139] sm:$0xff]
    %v142 = vsel %vm57, %v140, 0
    %144 = vmatprep.subr.mxu0 0.0
    %145 = vmatpush1.msra.mxu0 %v55
    %146 = vmatprep.subr.mxu0 0.0
    %147 = vmatpush1.msra.mxu0 0.0
    %148 = vmatprep.subr.mxu0 0.0
    %149 = vmatpush1.msra.mxu0 0.0
    %150 = vmatprep.subr.mxu0 0.0
    %151 = vmatpush1.msra.mxu0 0.0
    %152 = vmatprep.subr.mxu0 0.0
    %153 = vmatpush1.msra.mxu0 0.0
    %154 = vmatprep.subr.mxu0 0.0
    %155 = vmatpush1.msra.mxu0 0.0
    %156 = vmatprep.subr.mxu0 0.0
    %157 = vmatpush1.msra.mxu0 0.0
    %158 = vmatprep.subr.mxu0 0.0
    %159 = vmatpush1.msra.mxu0 0.0
    %160 = vmatprep.subr.mxu0 0.0
    %161 = vmatpush1.msra.mxu0 0.0
    %162 = vmatprep.subr.mxu0 0.0
    %163 = vmatpush1.msra.mxu0 0.0
    %164 = vmatprep.subr.mxu0 0.0
    %165 = vmatpush1.msra.mxu0 0.0
    %166 = vmatprep.subr.mxu0 0.0
    %167 = vmatpush1.msra.mxu0 0.0
    %168 = vmatprep.subr.mxu0 0.0
    %169 = vmatpush1.msra.mxu0 0.0
    %170 = vmatprep.subr.mxu0 0.0
    %171 = vmatpush1.msra.mxu0 0.0
    %172 = vmatprep.subr.mxu0 0.0
    %173 = vmatpush1.msra.mxu0 0.0
    %174 = vmatprep.subr.mxu0 0.0
    %175 = vmatpush1.msra.mxu0 0.0
    %176 = vmatprep.subr.mxu0 0.0
    %177 = vmatpush1.msra.mxu0 0.0
    %178 = vmatprep.subr.mxu0 0.0
    %179 = vmatpush1.msra.mxu0 0.0
    %180 = vmatprep.subr.mxu0 0.0
    %181 = vmatpush1.msra.mxu0 0.0
    %182 = vmatprep.subr.mxu0 0.0
    %183 = vmatpush1.msra.mxu0 0.0
    %184 = vmatprep.subr.mxu0 0.0
    %185 = vmatpush1.msra.mxu0 0.0
    %186 = vmatprep.subr.mxu0 0.0
    %187 = vmatpush1.msra.mxu0 0.0
    %188 = vmatprep.subr.mxu0 0.0
    %189 = vmatpush1.msra.mxu0 0.0
    %190 = vmatprep.subr.mxu0 0.0
    %191 = vmatpush1.msra.mxu0 0.0
    %192 = vmatprep.subr.mxu0 0.0
    %193 = vmatpush1.msra.mxu0 0.0
    %194 = vmatprep.subr.mxu0 0.0
    %195 = vmatpush1.msra.mxu0 0.0
    %196 = vmatprep.subr.mxu0 0.0
    %197 = vmatpush1.msra.mxu0 0.0
    %198 = vmatprep.subr.mxu0 0.0
    %199 = vmatpush1.msra.mxu0 0.0
    %200 = vmatprep.subr.mxu0 0.0
    %201 = vmatpush1.msra.mxu0 0.0
    %202 = vmatprep.subr.mxu0 0.0
    %203 = vmatpush1.msra.mxu0 0.0
    %204 = vmatprep.subr.mxu0 0.0
    %205 = vmatpush1.msra.mxu0 0.0
    %206 = vmatprep.subr.mxu0 0.0
    %207 = vmatpush1.msra.mxu0 0.0
    %208 = vmatprep.mubr.f32.mxu0 0.0
    %209 = vmatmul.mubr.f32.gmra.mrb[0].mxu0 %v142
    %v210 = vpop.f32.mrb[0].mxu0
    %v211 = vadd.f32 0.0, %v210
    %v212 = vpop.f32.mrb[0].mxu0
    %213 = vdwg.mxu0
    %s214 = scalar_lea.vmem [#allocation7], 64
    %v215 = vld [vmem:[%s214] sm:$0xff]
    %v216 = vld [vmem:[%s214 + $0x8] sm:$0xff]
    %v217 = vld [vmem:[%s214 + $0x10] sm:$0xff]
    %v218 = vld [vmem:[%s214 + $0x18] sm:$0xff]
    %v219 = vld [vmem:[%s214 + $0x20] sm:$0xff]
    %v220 = vld [vmem:[%s214 + $0x28] sm:$0xff]
    %v221 = vld [vmem:[%s214 + $0x30] sm:$0xff]
    %v222 = vld [vmem:[%s214 + $0x38] sm:$0xff]
    %vm223 = vcmask 523264
    %v225 = vsel %vm223, %v211, 0
    %227 = vmatprep.subr.mxu0 0.0
    %228 = vmatpush1.msra.mxu0 %v215
    %229 = vmatprep.subr.mxu0 0.0
    %230 = vmatpush1.msra.mxu0 %v216
    %231 = vmatprep.subr.mxu0 0.0
    %232 = vmatpush1.msra.mxu0 %v217
    %233 = vmatprep.subr.mxu0 0.0
    %234 = vmatpush1.msra.mxu0 %v218
    %235 = vmatprep.subr.mxu0 0.0
    %236 = vmatpush1.msra.mxu0 %v219
    %237 = vmatprep.subr.mxu0 0.0
    %238 = vmatpush1.msra.mxu0 %v220
    %239 = vmatprep.subr.mxu0 0.0
    %240 = vmatpush1.msra.mxu0 %v221
    %241 = vmatprep.subr.mxu0 0.0
    %242 = vmatpush1.msra.mxu0 %v222
    %243 = vmatprep.subr.mxu0 0.0
    %244 = vmatpush1.msra.mxu0 0.0
    %245 = vmatprep.subr.mxu0 0.0
    %246 = vmatpush1.msra.mxu0 0.0
    %247 = vmatprep.subr.mxu0 0.0
    %248 = vmatpush1.msra.mxu0 0.0
    %249 = vmatprep.subr.mxu0 0.0
    %250 = vmatpush1.msra.mxu0 0.0
    %251 = vmatprep.subr.mxu0 0.0
    %252 = vmatpush1.msra.mxu0 0.0
    %253 = vmatprep.subr.mxu0 0.0
    %254 = vmatpush1.msra.mxu0 0.0
    %255 = vmatprep.subr.mxu0 0.0
    %256 = vmatpush1.msra.mxu0 0.0
    %257 = vmatprep.subr.mxu0 0.0
    %258 = vmatpush1.msra.mxu0 0.0
    %259 = vmatprep.subr.mxu0 0.0
    %260 = vmatpush1.msra.mxu0 0.0
    %261 = vmatprep.subr.mxu0 0.0
    %262 = vmatpush1.msra.mxu0 0.0
    %263 = vmatprep.subr.mxu0 0.0
    %264 = vmatpush1.msra.mxu0 0.0
    %265 = vmatprep.subr.mxu0 0.0
    %266 = vmatpush1.msra.mxu0 0.0
    %267 = vmatprep.subr.mxu0 0.0
    %268 = vmatpush1.msra.mxu0 0.0
    %269 = vmatprep.subr.mxu0 0.0
    %270 = vmatpush1.msra.mxu0 0.0
    %271 = vmatprep.subr.mxu0 0.0
    %272 = vmatpush1.msra.mxu0 0.0
    %273 = vmatprep.subr.mxu0 0.0
    %274 = vmatpush1.msra.mxu0 0.0
    %275 = vmatprep.subr.mxu0 0.0
    %276 = vmatpush1.msra.mxu0 0.0
    %277 = vmatprep.subr.mxu0 0.0
    %278 = vmatpush1.msra.mxu0 0.0
    %279 = vmatprep.subr.mxu0 0.0
    %280 = vmatpush1.msra.mxu0 0.0
    %281 = vmatprep.subr.mxu0 0.0
    %282 = vmatpush1.msra.mxu0 0.0
    %283 = vmatprep.subr.mxu0 0.0
    %284 = vmatpush1.msra.mxu0 0.0
    %285 = vmatprep.subr.mxu0 0.0
    %286 = vmatpush1.msra.mxu0 0.0
    %287 = vmatprep.subr.mxu0 0.0
    %288 = vmatpush1.msra.mxu0 0.0
    %289 = vmatprep.subr.mxu0 0.0
    %290 = vmatpush1.msra.mxu0 0.0
    %291 = vmatprep.mubr.f32.mxu0 0.0
    %292 = vmatmul.mubr.f32.gmra.mrb[0].mxu0 %v225
    %v293 = vpop.f32.mrb[0].mxu0
    %v294 = vadd.f32 0.0, %v293
    %v295 = vpop.f32.mrb[0].mxu0
    %296 = vdwg.mxu0
    %v298 = vsel %vm223, %v128, 0
    %300 = vmatprep.subr.mxu0 0.0
    %301 = vmatpush1.msra.mxu0 %v131
    %302 = vmatprep.subr.mxu0 0.0
    %303 = vmatpush1.msra.mxu0 %v132
    %304 = vmatprep.subr.mxu0 0.0
    %305 = vmatpush1.msra.mxu0 %v133
    %306 = vmatprep.subr.mxu0 0.0
    %307 = vmatpush1.msra.mxu0 %v134
    %308 = vmatprep.subr.mxu0 0.0
    %309 = vmatpush1.msra.mxu0 %v135
    %310 = vmatprep.subr.mxu0 0.0
    %311 = vmatpush1.msra.mxu0 %v136
    %312 = vmatprep.subr.mxu0 0.0
    %313 = vmatpush1.msra.mxu0 %v137
    %314 = vmatprep.subr.mxu0 0.0
    %315 = vmatpush1.msra.mxu0 %v138
    %316 = vmatprep.subr.mxu0 0.0
    %317 = vmatpush1.msra.mxu0 0.0
    %318 = vmatprep.subr.mxu0 0.0
    %319 = vmatpush1.msra.mxu0 0.0
    %320 = vmatprep.subr.mxu0 0.0
    %321 = vmatpush1.msra.mxu0 0.0
    %322 = vmatprep.subr.mxu0 0.0
    %323 = vmatpush1.msra.mxu0 0.0
    %324 = vmatprep.subr.mxu0 0.0
    %325 = vmatpush1.msra.mxu0 0.0
    %326 = vmatprep.subr.mxu0 0.0
    %327 = vmatpush1.msra.mxu0 0.0
    %328 = vmatprep.subr.mxu0 0.0
    %329 = vmatpush1.msra.mxu0 0.0
    %330 = vmatprep.subr.mxu0 0.0
    %331 = vmatpush1.msra.mxu0 0.0
    %332 = vmatprep.subr.mxu0 0.0
    %333 = vmatpush1.msra.mxu0 0.0
    %334 = vmatprep.subr.mxu0 0.0
    %335 = vmatpush1.msra.mxu0 0.0
    %336 = vmatprep.subr.mxu0 0.0
    %337 = vmatpush1.msra.mxu0 0.0
    %338 = vmatprep.subr.mxu0 0.0
    %339 = vmatpush1.msra.mxu0 0.0
    %340 = vmatprep.subr.mxu0 0.0
    %341 = vmatpush1.msra.mxu0 0.0
    %342 = vmatprep.subr.mxu0 0.0
    %343 = vmatpush1.msra.mxu0 0.0
    %344 = vmatprep.subr.mxu0 0.0
    %345 = vmatpush1.msra.mxu0 0.0
    %346 = vmatprep.subr.mxu0 0.0
    %347 = vmatpush1.msra.mxu0 0.0
    %348 = vmatprep.subr.mxu0 0.0
    %349 = vmatpush1.msra.mxu0 0.0
    %350 = vmatprep.subr.mxu0 0.0
    %351 = vmatpush1.msra.mxu0 0.0
    %352 = vmatprep.subr.mxu0 0.0
    %353 = vmatpush1.msra.mxu0 0.0
    %354 = vmatprep.subr.mxu0 0.0
    %355 = vmatpush1.msra.mxu0 0.0
    %356 = vmatprep.subr.mxu0 0.0
    %357 = vmatpush1.msra.mxu0 0.0
    %358 = vmatprep.subr.mxu0 0.0
    %359 = vmatpush1.msra.mxu0 0.0
    %360 = vmatprep.subr.mxu0 0.0
    %361 = vmatpush1.msra.mxu0 0.0
    %362 = vmatprep.subr.mxu0 0.0
    %363 = vmatpush1.msra.mxu0 0.0
    %364 = vmatprep.mubr.f32.mxu0 0.0
    %365 = vmatmul.mubr.f32.gmra.mrb[0].mxu0 %v298
    %v366 = vpop.f32.mrb[0].mxu0
    %v367 = vadd.f32 %v294, %v366
    %v368 = vpop.f32.mrb[0].mxu0
    %369 = vdwg.mxu0
    %s370 = scalar_lea.vmem [#allocation5], 16
    %v371 = vld [vmem:[%s370] sm:$0xff]
    %v373 = vsel %vm57, %v371, 0
    %375 = vmatprep.subr.mxu0 0.0
    %376 = vmatpush1.msra.mxu0 %v55
    %377 = vmatprep.subr.mxu0 0.0
    %378 = vmatpush1.msra.mxu0 0.0
    %379 = vmatprep.subr.mxu0 0.0
    %380 = vmatpush1.msra.mxu0 0.0
    %381 = vmatprep.subr.mxu0 0.0
    %382 = vmatpush1.msra.mxu0 0.0
    %383 = vmatprep.subr.mxu0 0.0
    %384 = vmatpush1.msra.mxu0 0.0
    %385 = vmatprep.subr.mxu0 0.0
    %386 = vmatpush1.msra.mxu0 0.0
    %387 = vmatprep.subr.mxu0 0.0
    %388 = vmatpush1.msra.mxu0 0.0
    %389 = vmatprep.subr.mxu0 0.0
    %390 = vmatpush1.msra.mxu0 0.0
    %391 = vmatprep.subr.mxu0 0.0
    %392 = vmatpush1.msra.mxu0 0.0
    %393 = vmatprep.subr.mxu0 0.0
    %394 = vmatpush1.msra.mxu0 0.0
    %395 = vmatprep.subr.mxu0 0.0
    %396 = vmatpush1.msra.mxu0 0.0
    %397 = vmatprep.subr.mxu0 0.0
    %398 = vmatpush1.msra.mxu0 0.0
    %399 = vmatprep.subr.mxu0 0.0
    %400 = vmatpush1.msra.mxu0 0.0
    %401 = vmatprep.subr.mxu0 0.0
    %402 = vmatpush1.msra.mxu0 0.0
    %403 = vmatprep.subr.mxu0 0.0
    %404 = vmatpush1.msra.mxu0 0.0
    %405 = vmatprep.subr.mxu0 0.0
    %406 = vmatpush1.msra.mxu0 0.0
    %407 = vmatprep.subr.mxu0 0.0
    %408 = vmatpush1.msra.mxu0 0.0
    %409 = vmatprep.subr.mxu0 0.0
    %410 = vmatpush1.msra.mxu0 0.0
    %411 = vmatprep.subr.mxu0 0.0
    %412 = vmatpush1.msra.mxu0 0.0
    %413 = vmatprep.subr.mxu0 0.0
    %414 = vmatpush1.msra.mxu0 0.0
    %415 = vmatprep.subr.mxu0 0.0
    %416 = vmatpush1.msra.mxu0 0.0
    %417 = vmatprep.subr.mxu0 0.0
    %418 = vmatpush1.msra.mxu0 0.0
    %419 = vmatprep.subr.mxu0 0.0
    %420 = vmatpush1.msra.mxu0 0.0
    %421 = vmatprep.subr.mxu0 0.0
    %422 = vmatpush1.msra.mxu0 0.0
    %423 = vmatprep.subr.mxu0 0.0
    %424 = vmatpush1.msra.mxu0 0.0
    %425 = vmatprep.subr.mxu0 0.0
    %426 = vmatpush1.msra.mxu0 0.0
    %427 = vmatprep.subr.mxu0 0.0
    %428 = vmatpush1.msra.mxu0 0.0
    %429 = vmatprep.subr.mxu0 0.0
    %430 = vmatpush1.msra.mxu0 0.0
    %431 = vmatprep.subr.mxu0 0.0
    %432 = vmatpush1.msra.mxu0 0.0
    %433 = vmatprep.subr.mxu0 0.0
    %434 = vmatpush1.msra.mxu0 0.0
    %435 = vmatprep.subr.mxu0 0.0
    %436 = vmatpush1.msra.mxu0 0.0
    %437 = vmatprep.subr.mxu0 0.0
    %438 = vmatpush1.msra.mxu0 0.0
    %439 = vmatprep.mubr.f32.mxu0 0.0
    %440 = vmatmul.mubr.f32.gmra.mrb[0].mxu0 %v373
    %v441 = vpop.f32.mrb[0].mxu0
    %v442 = vadd.f32 0.0, %v441
    %v443 = vpop.f32.mrb[0].mxu0
    %444 = vdwg.mxu0
    %s445 = scalar_lea.vmem [#allocation7], 128
    %v446 = vld [vmem:[%s445] sm:$0xff]
    %v447 = vld [vmem:[%s445 + $0x8] sm:$0xff]
    %v448 = vld [vmem:[%s445 + $0x10] sm:$0xff]
    %v449 = vld [vmem:[%s445 + $0x18] sm:$0xff]
    %v450 = vld [vmem:[%s445 + $0x20] sm:$0xff]
    %v451 = vld [vmem:[%s445 + $0x28] sm:$0xff]
    %v452 = vld [vmem:[%s445 + $0x30] sm:$0xff]
    %v453 = vld [vmem:[%s445 + $0x38] sm:$0xff]
    %v455 = vsel %vm223, %v442, 0
    %457 = vmatprep.subr.mxu0 0.0
    %458 = vmatpush1.msra.mxu0 %v446
    %459 = vmatprep.subr.mxu0 0.0
    %460 = vmatpush1.msra.mxu0 %v447
    %461 = vmatprep.subr.mxu0 0.0
    %462 = vmatpush1.msra.mxu0 %v448
    %463 = vmatprep.subr.mxu0 0.0
    %464 = vmatpush1.msra.mxu0 %v449
    %465 = vmatprep.subr.mxu0 0.0
    %466 = vmatpush1.msra.mxu0 %v450
    %467 = vmatprep.subr.mxu0 0.0
    %468 = vmatpush1.msra.mxu0 %v451
    %469 = vmatprep.subr.mxu0 0.0
    %470 = vmatpush1.msra.mxu0 %v452
    %471 = vmatprep.subr.mxu0 0.0
    %472 = vmatpush1.msra.mxu0 %v453
    %473 = vmatprep.subr.mxu0 0.0
    %474 = vmatpush1.msra.mxu0 0.0
    %475 = vmatprep.subr.mxu0 0.0
    %476 = vmatpush1.msra.mxu0 0.0
    %477 = vmatprep.subr.mxu0 0.0
    %478 = vmatpush1.msra.mxu0 0.0
    %479 = vmatprep.subr.mxu0 0.0
    %480 = vmatpush1.msra.mxu0 0.0
    %481 = vmatprep.subr.mxu0 0.0
    %482 = vmatpush1.msra.mxu0 0.0
    %483 = vmatprep.subr.mxu0 0.0
    %484 = vmatpush1.msra.mxu0 0.0
    %485 = vmatprep.subr.mxu0 0.0
    %486 = vmatpush1.msra.mxu0 0.0
    %487 = vmatprep.subr.mxu0 0.0
    %488 = vmatpush1.msra.mxu0 0.0
    %489 = vmatprep.subr.mxu0 0.0
    %490 = vmatpush1.msra.mxu0 0.0
    %491 = vmatprep.subr.mxu0 0.0
    %492 = vmatpush1.msra.mxu0 0.0
    %493 = vmatprep.subr.mxu0 0.0
    %494 = vmatpush1.msra.mxu0 0.0
    %495 = vmatprep.subr.mxu0 0.0
    %496 = vmatpush1.msra.mxu0 0.0
    %497 = vmatprep.subr.mxu0 0.0
    %498 = vmatpush1.msra.mxu0 0.0
    %499 = vmatprep.subr.mxu0 0.0
    %500 = vmatpush1.msra.mxu0 0.0
    %501 = vmatprep.subr.mxu0 0.0
    %502 = vmatpush1.msra.mxu0 0.0
    %503 = vmatprep.subr.mxu0 0.0
    %504 = vmatpush1.msra.mxu0 0.0
    %505 = vmatprep.subr.mxu0 0.0
    %506 = vmatpush1.msra.mxu0 0.0
    %507 = vmatprep.subr.mxu0 0.0
    %508 = vmatpush1.msra.mxu0 0.0
    %509 = vmatprep.subr.mxu0 0.0
    %510 = vmatpush1.msra.mxu0 0.0
    %511 = vmatprep.subr.mxu0 0.0
    %512 = vmatpush1.msra.mxu0 0.0
    %513 = vmatprep.subr.mxu0 0.0
    %514 = vmatpush1.msra.mxu0 0.0
    %515 = vmatprep.subr.mxu0 0.0
    %516 = vmatpush1.msra.mxu0 0.0
    %517 = vmatprep.subr.mxu0 0.0
    %518 = vmatpush1.msra.mxu0 0.0
    %519 = vmatprep.subr.mxu0 0.0
    %520 = vmatpush1.msra.mxu0 0.0
    %521 = vmatprep.mubr.f32.mxu0 0.0
    %522 = vmatmul.mubr.f32.gmra.mrb[0].mxu0 %v455
    %v523 = vpop.f32.mrb[0].mxu0
    %v524 = vadd.f32 0.0, %v523
    %v525 = vpop.f32.mrb[0].mxu0
    %526 = vdwg.mxu0
    %v527 = vadd.f32 %v367, %v524
    %v528 = vmax.f32 %v527, 0.0
    %v529 = vsel %vm223, %v528, 0.0
    %530 = vadd.xlane.f32.xlu0 %v529
    %v531 = vpop.xlane.xlu0 %530
    %v532 = vrcp.pop 64.0
    %v533 = vmul.f32 %v531, %v532
    %v534 = vsub.f32 %v528, %v533
    %v535 = vmul.f32 %v534, %v534
    %v536 = vsel %vm223, %v535, 0.0
    %537 = vadd.xlane.f32.xlu0 %v536
    %v538 = vpop.xlane.xlu0 %537
    %v539 = vmul.f32 %v538, %v532
    %v540 = vadd.f32 %v539, 1e-05
    %v541 = vrsqrt.pop %v540
    %v542 = vmul.f32 %v534, %v541
    %543 = vst.msk [vmem:[#allocation8] sm:$0xff] %vm223, %v542
    // Predicated region
    $region26: #{tpu_custom_call.1} parent=1 // pred_check
      _
    $region27: #{tpu_custom_call.1} parent=1 // pred_check_branch
      %545 = sbr.rel (0) target = $region29
    $region28: #{tpu_custom_call.1} parent=1 // pred_region
      %s547 = ssub.s32 128, 128
      %548 = vsyncadd [#allocation4], %s547
      %s550 = sshll.u32 [#allocation8], 4
      %s551 = int_to_ptr.vmem [resolvable:$true] %s550
      %553 = dma.vmem_to_hbm [thread:$0]  %s551, 128, %s3, [#allocation4]
    $region29: #{tpu_custom_call.1} parent=1 // pred_fallthru
      _
    // Predicated region
    $region30: #{tpu_custom_call.1} parent=1 // pred_check
      _
    $region31: #{tpu_custom_call.1} parent=1 // pred_check_branch
      %555 = sbr.rel (0) target = $region33
    $region32: #{tpu_custom_call.1} parent=1 // pred_region
      %556 = dma.done [#allocation4], 128
    $region33: #{tpu_custom_call.1} parent=1 // pred_fallthru
      _
    %557 = vsyncpa [#allocation3], 1
    %558 = vsyncpa [#allocation6], 1
    %559 = vsyncpa [#allocation4], 1

</llo_original>
